<compile_context>
chip_gen: v6e
topology: v6e:2x2x1
jax: 0.10.0
libtpu: 0.0.40
codegen_flags: <defaults>
</compile_context>

<pallas_src>
import jax
import jax.numpy as jnp
from jax.experimental import pallas as pl
from jax.experimental.pallas import tpu as pltpu

K_NEIGHBORS = 32          # 'sample' argument of ball_query_wrapper
LRELU_SLOPE = 0.01        # F.leaky_relu default negative_slope
BN_EPS = 1e-5


# ----------------------------------------------------------------------------
# Pallas kernel
# ----------------------------------------------------------------------------
def _make_kernel(num_layers, ew_dtype, k_neighbors):
    """Kernel: per point tile, loop over K neighbors, run the shared MLP on
    (C_out, tn) lane-dense slabs and keep a running max in a VMEM scratch."""

    def kernel(xg_ref, f1_ref, *rest):
        params = rest[:-2]
        out_ref = rest[-2]           # (c_last, tn)
        acc_ref = rest[-1]           # (c_last, tn) scratch, ew_dtype

        w0g = params[0][...]         # (C0, Cg)  BN scale folded in
        w0f = params[1][...]         # (C0, C)   BN scale folded in
        sh0 = params[2][...]         # (C0, 1)   BN shift, ew_dtype
        ws = [params[2 * l + 1][...] for l in range(1, num_layers)]
        shs = [params[2 * l + 2][...] for l in range(1, num_layers)]

        # feature1 contribution: once per point tile, reused for all K.
        hf = jnp.dot(w0f, f1_ref[...], preferred_element_type=jnp.float32)
        hf = hf.astype(ew_dtype) + sh0                       # (C0, tn)

        acc_ref[...] = jnp.full_like(acc_ref, -jnp.inf)

        def body(k, carry):
            xk = xg_ref[k]                                   # (Cg, tn)
            h = jnp.dot(w0g, xk, preferred_element_type=jnp.float32)
            h = h.astype(ew_dtype) + hf
            h = jnp.maximum(h, LRELU_SLOPE * h)              # leaky_relu
            for w, sh in zip(ws, shs):
                h = jnp.dot(w, h.astype(w.dtype),
                            preferred_element_type=jnp.float32)
                h = h.astype(ew_dtype) + sh
                h = jnp.maximum(h, LRELU_SLOPE * h)
            acc_ref[...] = jnp.maximum(acc_ref[...], h)      # running K-max
            return carry

        jax.lax.fori_loop(0, k_neighbors, body, 0)
        out_ref[...] = acc_ref[...].astype(out_ref.dtype)

    return kernel


# ----------------------------------------------------------------------------
# pallas_call wrapper
# ----------------------------------------------------------------------------
def _run_mlp_max(xg, f1, folded, tn, ew_dtype, out_dtype, vmem_limit):
    """xg: (B, K, Cg, N); f1: (B, C, N); folded: [(w0g, w0f, sh0), (w1, sh1), ...]
    with weights already transposed to (C_out, C_in).  Returns (B, c_last, N)."""
    B, K, Cg, N = xg.shape
    C = f1.shape[1]
    widths = [grp[0].shape[0] for grp in folded]
    c_last = widths[-1]
    num_layers = len(folded)

    in_specs = [
        pl.BlockSpec((None, K, Cg, tn), lambda b, i: (b, 0, 0, i)),
        pl.BlockSpec((None, C, tn), lambda b, i: (b, 0, i)),
    ]
    flat = []
    for grp in folded:
        for arr in grp:
            # Grid-invariant parameter blocks (tiny; double-buffer cost is
            # negligible, so default pipelining is kept).
            in_specs.append(pl.BlockSpec(arr.shape, lambda b, i: (0, 0)))
            flat.append(arr)

    out_spec = pl.BlockSpec((None, c_last, tn), lambda b, i: (b, 0, i))
    out_shape = jax.ShapeDtypeStruct((B, c_last, N), out_dtype)

    kernel = _make_kernel(num_layers, ew_dtype, K)

    fn = pl.pallas_call(
        kernel,
        grid=(B, N // tn),
        in_specs=in_specs,
        out_specs=out_spec,
        out_shape=out_shape,
        scratch_shapes=[pltpu.VMEM((c_last, tn), ew_dtype)],
        compiler_params=pltpu.CompilerParams(
            dimension_semantics=("parallel", "parallel"),
            vmem_limit_bytes=vmem_limit),
    )
    return fn(xg, f1, *flat)


# ----------------------------------------------------------------------------
# Generation-aware tuning + layout-aware tiling.
# ----------------------------------------------------------------------------
def _tpu_tuning():
    kind = ""
    try:
        dev = jax.devices()[0]
        if dev.platform == "tpu":
            kind = dev.device_kind.lower()
    except Exception:
        pass
    if "v5" in kind:
        # 128 MiB VMEM; no bf16 VPU -> keep elementwise in f32.
        return dict(vmem_cap=96 << 20, tn_target=1024,
                    bf16_elementwise=False, min_grid_steps=1)
    if "v6" in kind:
        # 128 MiB VMEM; bf16 VALU available.
        return dict(vmem_cap=96 << 20, tn_target=1024,
                    bf16_elementwise=True, min_grid_steps=1)
    if "v7" in kind or "7x" in kind:
        # 64 MiB VMEM per TensorCore, 2 TCs -> smaller cap, keep grid fed.
        return dict(vmem_cap=40 << 20, tn_target=512,
                    bf16_elementwise=True, min_grid_steps=4)
    # Unknown generation / non-TPU fallback: conservative.
    return dict(vmem_cap=48 << 20, tn_target=512,
                bf16_elementwise=False, min_grid_steps=1)


def _sub_pad(c, itemsize):
    """Round a sublane (second-minor) extent up to the VMEM tile height."""
    tile = max(8, 32 // max(1, itemsize))
    return ((c + tile - 1) // tile) * tile


def _choose_tiling(N, B, K, Cg, C, widths, bpe, ew_bpe, out_bpe,
                   tn_target, vmem_cap, min_grid_steps):
    """Pick the point tile tn (multiple of 128 dividing N when possible) from
    a layout-aware VMEM estimate, plus the scoped-VMEM limit."""
    c_last = widths[-1]
    per_point = (
        2 * K * _sub_pad(Cg, bpe) * bpe            # xg block, double-buffered
        + 2 * _sub_pad(C, bpe) * bpe               # feature1 block, dbl-buffered
        + 2 * _sub_pad(c_last, out_bpe) * out_bpe  # output block, dbl-buffered
        + _sub_pad(c_last, ew_bpe) * ew_bpe        # running-max scratch
        + 2 * sum(_sub_pad(w, 4) * 4 for w in widths))  # live f32 activations (+headroom)
    budget = int(0.5 * vmem_cap)

    cands = [t for t in range(128, min(N, max(tn_target, 128)) + 1, 128)
             if N % t == 0]
    if not cands:
        cands = [N]                                # tiny-N fallback (full dim)
    tn = cands[0]
    for t in cands:                                # ascending: keep largest fit
        if t * per_point <= budget:
            tn = t
    while B * (N // tn) < min_grid_steps:          # keep both v7x TCs busy
        i = cands.index(tn)
        if i == 0:
            break
        tn = cands[i - 1]

    vmem_limit = int(min(max(2 * per_point * tn + (8 << 20), 32 << 20),
                         vmem_cap))
    return tn, vmem_limit


# ----------------------------------------------------------------------------
# Parameter folding: BN scale folded into W, weights transposed to (C_out, C_in),
# layer-0 split into grouped [pos_diff|feat2] part and feature1 part.
# ----------------------------------------------------------------------------
def fold_params(raw_params, in_channel, compute_dtype, ew_dtype):
    cg = 3 + in_channel
    folded = []
    for li, (w, scale, shift) in enumerate(raw_params):
        wt = (w * scale).T.astype(compute_dtype)        # (C_out, C_in)
        sh = shift.reshape(-1, 1).astype(ew_dtype)      # (C_out, 1)
        if li == 0:
            folded.append((wt[:, :cg], wt[:, cg:], sh))
        else:
            folded.append((wt, sh))
    return folded


# ----------------------------------------------------------------------------
# Glue: KNN (== ball query + KNN fallback), neighbor gather, layout.
# ----------------------------------------------------------------------------
def flow_embedding_forward(pos1, pos2, feature1, feature2, radius, raw_params,
                           compute_dtype=jnp.bfloat16, out_dtype=None):
    """pos1/pos2: (B, 3, N); feature1/feature2: (B, C, N).
    Returns (pos1, feat1_new) with feat1_new: (B, mlp[-1], N)."""
    del radius  # ball-query-with-KNN-fallback == plain KNN (see header)
    B, _, N = pos1.shape
    C = feature1.shape[1]
    Cg = 3 + C
    widths = [w.shape[1] for (w, _, _) in raw_params]

    tuning = _tpu_tuning()
    ew_dtype = (compute_dtype
                if (tuning["bf16_elementwise"]
                    and jnp.dtype(compute_dtype) == jnp.dtype(jnp.bfloat16))
                else jnp.float32)
    if out_dtype is None:
        out_dtype = compute_dtype   # halves output HBM traffic in the bf16 path

    tn, vmem_limit = _choose_tiling(
        N=N, B=B, K=K_NEIGHBORS, Cg=Cg, C=C, widths=widths,
        bpe=jnp.dtype(compute_dtype).itemsize,
        ew_bpe=jnp.dtype(ew_dtype).itemsize,
        out_bpe=jnp.dtype(out_dtype).itemsize,
        tn_target=tuning["tn_target"], vmem_cap=tuning["vmem_cap"],
        min_grid_steps=tuning["min_grid_steps"])

    # KNN indices, sorted by ascending distance.
    # TODO(synk): for large N this O(N*N2) distance matrix + XLA gather +
    # transpose dominates HBM traffic; fuse it into the kernel via scalar
    # prefetch + manual DMA gather (memory_space=pl.ANY on pos2/feat2).
    pos1_t = jnp.transpose(pos1, (0, 2, 1)).astype(jnp.float32)       # (B, N, 3)
    pos2_t = jnp.transpose(pos2, (0, 2, 1)).astype(jnp.float32)       # (B, N2, 3)
    feat2_t = jnp.transpose(feature2, (0, 2, 1)).astype(jnp.float32)  # (B, N2, C)
    d2 = jnp.sum((pos1_t[:, :, None, :] - pos2_t[:, None, :, :]) ** 2, axis=-1)
    _, idx = jax.lax.top_k(-d2, K_NEIGHBORS)                          # (B, N, K)
    idx = idx.astype(jnp.int32)

    gather = jax.vmap(lambda f, i: f[i])          # (N2, D), (N, K) -> (N, K, D)
    pos2_grp = gather(pos2_t, idx)                                    # (B, N, K, 3)
    feat2_grp = gather(feat2_t, idx)                                  # (B, N, K, C)
    pos_diff = pos2_grp - pos1_t[:, :, None, :]                       # (B, N, K, 3)

    # Grouped tensor, points-on-lanes: (B, K, Cg, N), channel order
    # [pos_diff, feat2].  bf16 here quantizes pos_diff (documented; within the
    # 5e-2 bf16 tolerance).  feature1 stays in its native (B, C, N) layout.
    xg = jnp.concatenate([pos_diff, feat2_grp], axis=-1)              # (B, N, K, Cg)
    xg = jnp.transpose(xg, (0, 2, 3, 1)).astype(compute_dtype)        # (B, K, Cg, N)
    f1 = feature1.astype(compute_dtype)                               # (B, C, N)

    folded = fold_params(raw_params, C, compute_dtype, ew_dtype)
    feat1_new = _run_mlp_max(xg, f1, folded, tn, ew_dtype, out_dtype,
                             vmem_limit)                              # (B, c_last, N)
    return pos1, feat1_new


# ----------------------------------------------------------------------------
# Deterministic parameter construction (Conv2d 1x1 no-bias + BatchNorm2d).
# ----------------------------------------------------------------------------
def make_params(in_channel, mlp, key):
    last = in_channel * 2 + 3
    params = []
    for out_channel in mlp:
        key, kw, kg, kb, km, kv = jax.random.split(key, 6)
        w = (jax.random.normal(kw, (last, out_channel), jnp.float32)
             * (1.0 / jnp.sqrt(last)))
        gamma = 1.0 + 0.1 * jax.random.normal(kg, (1, out_channel), jnp.float32)
        beta = 0.1 * jax.random.normal(kb, (1, out_channel), jnp.float32)
        r_mean = 0.1 * jax.random.normal(km, (1, out_channel), jnp.float32)
        r_var = 1.0 + 0.1 * jax.random.uniform(kv, (1, out_channel), jnp.float32)
        scale = gamma / jnp.sqrt(r_var + BN_EPS)
        shift = beta - r_mean * scale
        params.append((w, scale, shift))
        last = out_channel
    return params


# ----------------------------------------------------------------------------
# Plain-JAX reference of the full forward (f32).
# ----------------------------------------------------------------------------
def _reference_forward(pos1, pos2, feature1, feature2, raw_params):
    B, _, N = pos1.shape
    C = feature1.shape[1]
    pos1_t = jnp.transpose(pos1, (0, 2, 1)).astype(jnp.float32)
    pos2_t = jnp.transpose(pos2, (0, 2, 1)).astype(jnp.float32)
    feat1_t = jnp.transpose(feature1, (0, 2, 1)).astype(jnp.float32)
    feat2_t = jnp.transpose(feature2, (0, 2, 1)).astype(jnp.float32)

    d2 = jnp.sum((pos1_t[:, :, None, :] - pos2_t[:, None, :, :]) ** 2, axis=-1)
    _, idx = jax.lax.top_k(-d2, K_NEIGHBORS)
    gather = jax.vmap(lambda f, i: f[i])
    pos2_grp = gather(pos2_t, idx)
    feat2_grp = gather(feat2_t, idx)
    pos_diff = pos2_grp - pos1_t[:, :, None, :]
    feat1_rep = jnp.broadcast_to(feat1_t[:, :, None, :], (B, N, K_NEIGHBORS, C))
    h = jnp.concatenate([pos_diff, feat2_grp, feat1_rep], axis=-1)
    for (w, scale, shift) in raw_params:
        h = jnp.einsum("bnkc,cd->bnkd", h, w,
                       precision=jax.lax.Precision.HIGHEST)
        h = h * scale + shift
        h = jnp.where(h > 0, h, LRELU_SLOPE * h)
    out = jnp.max(h, axis=2)                        # (B, N, c_last)
    return jnp.transpose(out, (0, 2, 1))            # (B, c_last, N)


if __name__ == "__main__":
    key = jax.random.PRNGKey(0)
    B, C, N = 2, 4, 64          # batch, in_channel, npoint
    mlp = [32, 64]
    radius = 0.5

    k1, k2, k3, k4, kp = jax.random.split(key, 5)
    pos1 = jax.random.normal(k1, (B, 3, N), jnp.float32)
    pos2 = jax.random.normal(k2, (B, 3, N), jnp.float32)
    feature1 = jax.random.normal(k3, (B, C, N), jnp.float32)
    feature2 = jax.random.normal(k4, (B, C, N), jnp.float32)

    raw_params = make_params(C, mlp, kp)

    # Perf path: bf16 I/O + weights (bf16 elementwise on v6e/v7x only).
    pos1_out, feat_bf16 = flow_embedding_forward(
        pos1, pos2, feature1, feature2, radius, raw_params,
        compute_dtype=jnp.bfloat16)
    feat_bf16 = jax.block_until_ready(feat_bf16)
    assert pos1_out.shape == (B, 3, N)
    assert feat_bf16.shape == (B, mlp[-1], N)

    # f32 path for a tight numerical check of the kernel structure.
    _, feat_f32 = flow_embedding_forward(
        pos1, pos2, feature1, feature2, radius, raw_params,
        compute_dtype=jnp.float32)
    feat_f32 = jax.block_until_ready(feat_f32)

    ref = _reference_forward(pos1, pos2, feature1, feature2, raw_params)
    if not jnp.allclose(feat_f32.astype(jnp.float32), ref, rtol=1e-3, atol=1e-3):
        raise AssertionError("Pallas kernel (f32) mismatch vs reference")
    if not jnp.allclose(feat_bf16.astype(jnp.float32), ref, rtol=5e-2, atol=5e-2):
        raise AssertionError("Pallas kernel (bf16) mismatch vs reference")

    print("KERNEL_OK")
</pallas_src>

<mosaic_0001>
module attributes {stable_mosaic.version = 11 : i64} {
  func.func @kernel(%arg0: i32, %arg1: i32, %arg2: memref<1x32x7x64xbf16, #tpu.memory_space<vmem>>, %arg3: memref<1x4x64xbf16, #tpu.memory_space<vmem>>, %arg4: memref<32x7xbf16, #tpu.memory_space<vmem>>, %arg5: memref<32x4xbf16, #tpu.memory_space<vmem>>, %arg6: memref<32x1xf32, #tpu.memory_space<vmem>>, %arg7: memref<64x32xbf16, #tpu.memory_space<vmem>>, %arg8: memref<64x1xf32, #tpu.memory_space<vmem>>, %arg9: memref<1x64x64xbf16, #tpu.memory_space<vmem>>, %arg10: memref<64x64xf32, #tpu.memory_space<vmem>>) attributes {dimension_semantics = [#tpu.dimension_semantics<parallel>, #tpu.dimension_semantics<parallel>], iteration_bounds = array<i64: 2, 1>, scalar_prefetch = 0 : i64, scratch_operands = 1 : i64, tpu.core_type = #tpu.core_type<tc>, window_params = [{transform_indices = @transform_0, window_bounds = array<i64: 1, 32, 7, 64>}, {transform_indices = @transform_1, window_bounds = array<i64: 1, 4, 64>}, {pipeline_mode = #tpu.pipeline_mode<synchronous>, transform_indices = @transform_2, window_bounds = array<i64: 32, 7>}, {pipeline_mode = #tpu.pipeline_mode<synchronous>, transform_indices = @transform_3, window_bounds = array<i64: 32, 4>}, {pipeline_mode = #tpu.pipeline_mode<synchronous>, transform_indices = @transform_4, window_bounds = array<i64: 32, 1>}, {pipeline_mode = #tpu.pipeline_mode<synchronous>, transform_indices = @transform_5, window_bounds = array<i64: 64, 32>}, {pipeline_mode = #tpu.pipeline_mode<synchronous>, transform_indices = @transform_6, window_bounds = array<i64: 64, 1>}, {transform_indices = @transform_7, window_bounds = array<i64: 1, 64, 64>}]} {
    %c0 = arith.constant 0 : index
    %c0_0 = arith.constant 0 : index
    %0 = vector.load %arg4[%c0, %c0_0] : memref<32x7xbf16, #tpu.memory_space<vmem>>, vector<32x7xbf16>
    %c0_1 = arith.constant 0 : index
    %c0_2 = arith.constant 0 : index
    %1 = vector.load %arg5[%c0_1, %c0_2] : memref<32x4xbf16, #tpu.memory_space<vmem>>, vector<32x4xbf16>
    %c0_3 = arith.constant 0 : index
    %c0_4 = arith.constant 0 : index
    %2 = vector.load %arg6[%c0_3, %c0_4] : memref<32x1xf32, #tpu.memory_space<vmem>>, vector<32x1xf32>
    %c0_5 = arith.constant 0 : index
    %c0_6 = arith.constant 0 : index
    %3 = vector.load %arg7[%c0_5, %c0_6] : memref<64x32xbf16, #tpu.memory_space<vmem>>, vector<64x32xbf16>
    %c0_7 = arith.constant 0 : index
    %c0_8 = arith.constant 0 : index
    %4 = vector.load %arg8[%c0_7, %c0_8] : memref<64x1xf32, #tpu.memory_space<vmem>>, vector<64x1xf32>
    %c0_9 = arith.constant 0 : index
    %c0_10 = arith.constant 0 : index
    %c0_11 = arith.constant 0 : index
    %5 = vector.load %arg3[%c0_9, %c0_10, %c0_11] : memref<1x4x64xbf16, #tpu.memory_space<vmem>>, vector<1x4x64xbf16>
    %6 = vector.shape_cast %5 : vector<1x4x64xbf16> to vector<4x64xbf16>
    %cst = arith.constant dense<0.000000e+00> : vector<32x64xf32>
    %7 = tpu.matmul %1, %6, %cst {dimension_numbers = #tpu.dot_dimension_numbers<[1], [0], [0], [1], [0, 0, 1, 1], [], []>} : vector<32x4xbf16>, vector<4x64xbf16>, vector<32x64xf32> -> vector<32x64xf32>
    %8 = vector.broadcast %2 : vector<32x1xf32> to vector<32x64xf32>
    %9 = arith.addf %7, %8 : vector<32x64xf32>
    %cst_12 = arith.constant 0xFF800000 : f32
    %10 = vector.broadcast %cst_12 : f32 to vector<64x64xf32>
    %c0_13 = arith.constant 0 : index
    %c0_14 = arith.constant 0 : index
    %11 = vector.load %arg10[%c0_13, %c0_14] : memref<64x64xf32, #tpu.memory_space<vmem>>, vector<64x64xf32>
    tpu.vector_store %arg10[%c0_13, %c0_14], %10 {strides = array<i32>} : memref<64x64xf32, #tpu.memory_space<vmem>>, vector<64x64xf32>,
    %c0_i32 = arith.constant 0 : i32
    %c32_i32 = arith.constant 32 : i32
    %12 = arith.addi %c0_i32, %c32_i32 : i32
    %c1_i32 = arith.constant 1 : i32
    scf.for %arg11 = %c0_i32 to %12 step %c1_i32  : i32 {
      %c0_21 = arith.constant 0 : index
      %18 = arith.index_cast %arg11 : i32 to index
      %c0_22 = arith.constant 0 : index
      %c0_23 = arith.constant 0 : index
      %19 = vector.load %arg2[%c0_21, %18, %c0_22, %c0_23] : memref<1x32x7x64xbf16, #tpu.memory_space<vmem>>, vector<1x1x7x64xbf16>
      %20 = vector.shape_cast %19 : vector<1x1x7x64xbf16> to vector<7x64xbf16>
      %cst_24 = arith.constant dense<0.000000e+00> : vector<32x64xf32>
      %21 = tpu.matmul %0, %20, %cst_24 {dimension_numbers = #tpu.dot_dimension_numbers<[1], [0], [0], [1], [0, 0, 1, 1], [], []>} : vector<32x7xbf16>, vector<7x64xbf16>, vector<32x64xf32> -> vector<32x64xf32>
      %22 = arith.addf %21, %9 : vector<32x64xf32>
      %cst_25 = arith.constant 0.00999999977 : f32
      %23 = vector.broadcast %cst_25 : f32 to vector<32x64xf32>
      %24 = arith.mulf %23, %22 : vector<32x64xf32>
      %25 = arith.maximumf %22, %24 : vector<32x64xf32>
      %26 = arith.truncf %25 : vector<32x64xf32> to vector<32x64xbf16>
      %cst_26 = arith.constant dense<0.000000e+00> : vector<64x64xf32>
      %27 = tpu.matmul %3, %26, %cst_26 {dimension_numbers = #tpu.dot_dimension_numbers<[1], [0], [0], [1], [0, 0, 1, 1], [], []>} : vector<64x32xbf16>, vector<32x64xbf16>, vector<64x64xf32> -> vector<64x64xf32>
      %28 = vector.broadcast %4 : vector<64x1xf32> to vector<64x64xf32>
      %29 = arith.addf %27, %28 : vector<64x64xf32>
      %cst_27 = arith.constant 0.00999999977 : f32
      %30 = vector.broadcast %cst_27 : f32 to vector<64x64xf32>
      %31 = arith.mulf %30, %29 : vector<64x64xf32>
      %32 = arith.maximumf %29, %31 : vector<64x64xf32>
      %c0_28 = arith.constant 0 : index
      %c0_29 = arith.constant 0 : index
      %33 = vector.load %arg10[%c0_28, %c0_29] : memref<64x64xf32, #tpu.memory_space<vmem>>, vector<64x64xf32>
      %34 = arith.maximumf %33, %32 : vector<64x64xf32>
      %c0_30 = arith.constant 0 : index
      %c0_31 = arith.constant 0 : index
      %35 = vector.load %arg10[%c0_30, %c0_31] : memref<64x64xf32, #tpu.memory_space<vmem>>, vector<64x64xf32>
      tpu.vector_store %arg10[%c0_30, %c0_31], %34 {strides = array<i32>} : memref<64x64xf32, #tpu.memory_space<vmem>>, vector<64x64xf32>,
    }
    %c32_i32_15 = arith.constant 32 : i32
    %c0_16 = arith.constant 0 : index
    %c0_17 = arith.constant 0 : index
    %13 = vector.load %arg10[%c0_16, %c0_17] : memref<64x64xf32, #tpu.memory_space<vmem>>, vector<64x64xf32>
    %14 = arith.truncf %13 : vector<64x64xf32> to vector<64x64xbf16>
    %c0_18 = arith.constant 0 : index
    %c0_19 = arith.constant 0 : index
    %c0_20 = arith.constant 0 : index
    %15 = vector.load %arg9[%c0_18, %c0_19, %c0_20] : memref<1x64x64xbf16, #tpu.memory_space<vmem>>, vector<1x64x64xbf16>
    %16 = vector.shape_cast %15 : vector<1x64x64xbf16> to vector<64x64xbf16>
    %17 = vector.shape_cast %14 : vector<64x64xbf16> to vector<1x64x64xbf16>
    tpu.vector_store %arg9[%c0_18, %c0_19, %c0_20], %17 {strides = array<i32>} : memref<1x64x64xbf16, #tpu.memory_space<vmem>>, vector<1x64x64xbf16>,
    return
  }
  func.func @transform_0(%arg0: i32, %arg1: i32) -> (i32, i32, i32, i32) {
    %c0_i32 = arith.constant 0 : i32
    %c0_i32_0 = arith.constant 0 : i32
    %c0_i32_1 = arith.constant 0 : i32
    return %arg0, %c0_i32, %c0_i32_0, %arg1 : i32, i32, i32, i32
  }
  func.func @transform_1(%arg0: i32, %arg1: i32) -> (i32, i32, i32) {
    %c0_i32 = arith.constant 0 : i32
    %c0_i32_0 = arith.constant 0 : i32
    return %arg0, %c0_i32, %arg1 : i32, i32, i32
  }
  func.func @transform_2(%arg0: i32, %arg1: i32) -> (i32, i32) {
    %c0_i32 = arith.constant 0 : i32
    %c0_i32_0 = arith.constant 0 : i32
    %c0_i32_1 = arith.constant 0 : i32
    return %c0_i32, %c0_i32_0 : i32, i32
  }
  func.func @transform_3(%arg0: i32, %arg1: i32) -> (i32, i32) {
    %c0_i32 = arith.constant 0 : i32
    %c0_i32_0 = arith.constant 0 : i32
    %c0_i32_1 = arith.constant 0 : i32
    return %c0_i32, %c0_i32_0 : i32, i32
  }
  func.func @transform_4(%arg0: i32, %arg1: i32) -> (i32, i32) {
    %c0_i32 = arith.constant 0 : i32
    %c0_i32_0 = arith.constant 0 : i32
    %c0_i32_1 = arith.constant 0 : i32
    return %c0_i32, %c0_i32_0 : i32, i32
  }
  func.func @transform_5(%arg0: i32, %arg1: i32) -> (i32, i32) {
    %c0_i32 = arith.constant 0 : i32
    %c0_i32_0 = arith.constant 0 : i32
    %c0_i32_1 = arith.constant 0 : i32
    return %c0_i32, %c0_i32_0 : i32, i32
  }
  func.func @transform_6(%arg0: i32, %arg1: i32) -> (i32, i32) {
    %c0_i32 = arith.constant 0 : i32
    %c0_i32_0 = arith.constant 0 : i32
    %c0_i32_1 = arith.constant 0 : i32
    return %c0_i32, %c0_i32_0 : i32, i32
  }
  func.func @transform_7(%arg0: i32, %arg1: i32) -> (i32, i32, i32) {
    %c0_i32 = arith.constant 0 : i32
    %c0_i32_0 = arith.constant 0 : i32
    return %arg0, %c0_i32, %arg1 : i32, i32, i32
  }
}

</mosaic_0001>

<llo_original>
// kernel: tpu_custom_call.1
$region0: #{tpu_custom_call.1}
  #allocation0 [shape = 'u32[]', space=smem, size = 0x4, offset = 0x4, fixed_abs, tag = 'smem constant byte address 0x4 - core index']
  #allocation1 [shape = 'u32[144,128]{1,0:T(1,128)}', space=vmem, size = 0x12000, scoped, tag = 'internal scratch']
  #allocation2 [shape = 'f32[64,64]{1,0:T(8,128)}', space=vmem, size = 0x8000, scoped, tag = 'scratch operand']
  %s0 = inlined_call_operand.vmem [shape: bf16[2,32,7,64], index: 0, kind: input, shape index: {}]
  %s1 = inlined_call_operand.vmem [shape: bf16[2,4,64], index: 1, kind: input, shape index: {}]
  %s2 = inlined_call_operand.vmem [shape: bf16[32,7], index: 2, kind: input, shape index: {}]
  %s3 = inlined_call_operand.vmem [shape: bf16[32,4], index: 3, kind: input, shape index: {}]
  %s4 = inlined_call_operand.vmem [shape: f32[32,1], index: 4, kind: input, shape index: {}]
  %s5 = inlined_call_operand.vmem [shape: bf16[64,32], index: 5, kind: input, shape index: {}]
  %s6 = inlined_call_operand.vmem [shape: f32[64,1], index: 6, kind: input, shape index: {}]
  %s7 = inlined_call_operand.hbm [shape: bf16[2,64,64], index: 7, kind: output, shape index: {}]
  %s8 = sld [smem:[#allocation0]]
  $region68: #{tpu_custom_call.1} parent=0
    _
  %s10 = ssub.s32 1, %s8
  %s11 = scalar_select 0, %s10, %s8
  $region1: #{tpu_custom_call.1} parent=0
    #allocation3 [shape = 'u8[32768]{0}', space=vmem, size = 0x8000, scoped, tag = 'output window, operand 0']
    #allocation4 [shape = 's32[2]{0}', space=sflag, size = 0x8, scoped, tag = 'scoped memory for tpu_custom_call.1']
    %12 = vsyncpa [#allocation4], 0
    %s13 = scalar_lea.sflag [#allocation4], 1
    %14 = vsyncpa %s13, 0
    loop: start=0, step=1, limit=4
    $region2: #{tpu_custom_call.1} parent=1 // loop_pre_header
      _
    $region3: #{tpu_custom_call.1} parent=1 // loop_header
      %s16 = sphi 0, %s20
      %p17 = scmp.ge.s32.totalorder %s16, 4
      %s23 = sphi 0, %s35
      %s24 = sphi 0, %s31
      %s25 = sphi 0, %s23
      %s26 = sphi 0, %s24
      %s27 = sphi 0, %s25
      %s28 = sphi 0, %s26
      %s40 = sphi 0, %s42
      %s43 = sphi 0, %s40
      %s44 = sphi 0, %s43
      %s60 = sphi 0, %s44
      %s68 = sphi 0, %s70
      %s71 = sphi 0, %s68
      %s72 = sphi 0, %s71
      %s88 = sphi 0, %s72
      %s92 = sphi 0, %s92
      %s94 = sphi 0, %s92
      %s95 = sphi 0, %s94
      %s109 = sphi 0, %s95
      %s113 = sphi 0, %s113
      %s115 = sphi 0, %s113
      %s116 = sphi 0, %s115
      %s130 = sphi 0, %s116
      %s134 = sphi 0, %s134
      %s136 = sphi 0, %s134
      %s137 = sphi 0, %s136
      %s151 = sphi 0, %s137
      %s155 = sphi 0, %s155
      %s157 = sphi 0, %s155
      %s158 = sphi 0, %s157
      %s172 = sphi 0, %s158
      %s176 = sphi 0, %s176
      %s178 = sphi 0, %s176
      %s179 = sphi 0, %s178
      %s193 = sphi 0, %s179
      %s201 = sphi 0, %s203
      %s204 = sphi 0, %s201
      %s205 = sphi 0, %s204
      %s221 = sphi 0, %s205
    $region4: #{tpu_custom_call.1} parent=1 // loop_header_branch
      %19 = sbr.rel (%p17) target = $region8
    $region5: #{tpu_custom_call.1} parent=1 // loop_body
      %s21 = ssub.s32 %s16, 1
      %s22 = ssub.s32 %s16, 2
      %s29 = sadd.s32 1, %s24
      %p30 = scmp.ge.s32.totalorder %s29, 1
      %s31 = scalar_select %p30, 0, %s29
      %s32 = sadd.s32 1, %s23
      %s33 = scalar_select %p30, %s32, %s23
      %p34 = scmp.ge.s32.totalorder %s33, 2
      %s35 = scalar_select %p34, 0, %s33
      %s36 = ssub.s32 %s23, %s35
      %s37 = ssub.s32 %s24, %s31
      %s38 = sor.u32 %s36, %s37
      %p39 = scmp.eq.s32.totalorder %s38, 0
      %s41 = sadd.s32 %s40, 1
      %s42 = scalar_select %p39, %s40, %s41
      %p45 = pneg %p39
      %p46 = scmp.eq.s32.totalorder %s16, 1
      %p47 = por %p45, %p46
      %p48 = scmp.ne.s32.totalorder %s40, %s43
      %p49 = scmp.eq.s32.totalorder %s16, 0
      %p50 = por %p48, %p49
      %p51 = scmp.ne.s32.totalorder %s40, %s43
      %p52 = scmp.eq.s32.totalorder %s21, 1
      %p53 = por %p51, %p52
      %p54 = scmp.ne.s32.totalorder %s43, %s44
      %p55 = scmp.eq.s32.totalorder %s21, 0
      %p56 = por %p54, %p55
      %p57 = scmp.ne.s32.totalorder %s43, %s44
      %p58 = scmp.eq.s32.totalorder %s22, 1
      %p59 = por %p57, %p58
      %p61 = scmp.ne.s32.totalorder %s44, %s60
      %p62 = scmp.eq.s32.totalorder %s22, 0
      %p63 = por %p61, %p62
      %s64 = ssub.s32 %s23, %s35
      %s65 = ssub.s32 %s24, %s31
      %s66 = sor.u32 %s64, %s65
      %p67 = scmp.eq.s32.totalorder %s66, 0
      %s69 = sadd.s32 %s68, 1
      %s70 = scalar_select %p67, %s68, %s69
      %p73 = pneg %p67
      %p74 = scmp.eq.s32.totalorder %s16, 1
      %p75 = por %p73, %p74
      %p76 = scmp.ne.s32.totalorder %s68, %s71
      %p77 = scmp.eq.s32.totalorder %s16, 0
      %p78 = por %p76, %p77
      %p79 = scmp.ne.s32.totalorder %s68, %s71
      %p80 = scmp.eq.s32.totalorder %s21, 1
      %p81 = por %p79, %p80
      %p82 = scmp.ne.s32.totalorder %s71, %s72
      %p83 = scmp.eq.s32.totalorder %s21, 0
      %p84 = por %p82, %p83
      %p85 = scmp.ne.s32.totalorder %s71, %s72
      %p86 = scmp.eq.s32.totalorder %s22, 1
      %p87 = por %p85, %p86
      %p89 = scmp.ne.s32.totalorder %s72, %s88
      %p90 = scmp.eq.s32.totalorder %s22, 0
      %p91 = por %p89, %p90
      %s93 = sadd.s32 %s92, 1
      %p96 = scmp.eq.s32.totalorder %s16, 1
      %p97 = scmp.ne.s32.totalorder %s92, %s94
      %p98 = scmp.eq.s32.totalorder %s16, 0
      %p99 = por %p97, %p98
      %p100 = scmp.ne.s32.totalorder %s92, %s94
      %p101 = scmp.eq.s32.totalorder %s21, 1
      %p102 = por %p100, %p101
      %p103 = scmp.ne.s32.totalorder %s94, %s95
      %p104 = scmp.eq.s32.totalorder %s21, 0
      %p105 = por %p103, %p104
      %p106 = scmp.ne.s32.totalorder %s94, %s95
      %p107 = scmp.eq.s32.totalorder %s22, 1
      %p108 = por %p106, %p107
      %p110 = scmp.ne.s32.totalorder %s95, %s109
      %p111 = scmp.eq.s32.totalorder %s22, 0
      %p112 = por %p110, %p111
      %s114 = sadd.s32 %s113, 1
      %p117 = scmp.eq.s32.totalorder %s16, 1
      %p118 = scmp.ne.s32.totalorder %s113, %s115
      %p119 = scmp.eq.s32.totalorder %s16, 0
      %p120 = por %p118, %p119
      %p121 = scmp.ne.s32.totalorder %s113, %s115
      %p122 = scmp.eq.s32.totalorder %s21, 1
      %p123 = por %p121, %p122
      %p124 = scmp.ne.s32.totalorder %s115, %s116
      %p125 = scmp.eq.s32.totalorder %s21, 0
      %p126 = por %p124, %p125
      %p127 = scmp.ne.s32.totalorder %s115, %s116
      %p128 = scmp.eq.s32.totalorder %s22, 1
      %p129 = por %p127, %p128
      %p131 = scmp.ne.s32.totalorder %s116, %s130
      %p132 = scmp.eq.s32.totalorder %s22, 0
      %p133 = por %p131, %p132
      %s135 = sadd.s32 %s134, 1
      %p138 = scmp.eq.s32.totalorder %s16, 1
      %p139 = scmp.ne.s32.totalorder %s134, %s136
      %p140 = scmp.eq.s32.totalorder %s16, 0
      %p141 = por %p139, %p140
      %p142 = scmp.ne.s32.totalorder %s134, %s136
      %p143 = scmp.eq.s32.totalorder %s21, 1
      %p144 = por %p142, %p143
      %p145 = scmp.ne.s32.totalorder %s136, %s137
      %p146 = scmp.eq.s32.totalorder %s21, 0
      %p147 = por %p145, %p146
      %p148 = scmp.ne.s32.totalorder %s136, %s137
      %p149 = scmp.eq.s32.totalorder %s22, 1
      %p150 = por %p148, %p149
      %p152 = scmp.ne.s32.totalorder %s137, %s151
      %p153 = scmp.eq.s32.totalorder %s22, 0
      %p154 = por %p152, %p153
      %s156 = sadd.s32 %s155, 1
      %p159 = scmp.eq.s32.totalorder %s16, 1
      %p160 = scmp.ne.s32.totalorder %s155, %s157
      %p161 = scmp.eq.s32.totalorder %s16, 0
      %p162 = por %p160, %p161
      %p163 = scmp.ne.s32.totalorder %s155, %s157
      %p164 = scmp.eq.s32.totalorder %s21, 1
      %p165 = por %p163, %p164
      %p166 = scmp.ne.s32.totalorder %s157, %s158
      %p167 = scmp.eq.s32.totalorder %s21, 0
      %p168 = por %p166, %p167
      %p169 = scmp.ne.s32.totalorder %s157, %s158
      %p170 = scmp.eq.s32.totalorder %s22, 1
      %p171 = por %p169, %p170
      %p173 = scmp.ne.s32.totalorder %s158, %s172
      %p174 = scmp.eq.s32.totalorder %s22, 0
      %p175 = por %p173, %p174
      %s177 = sadd.s32 %s176, 1
      %p180 = scmp.eq.s32.totalorder %s16, 1
      %p181 = scmp.ne.s32.totalorder %s176, %s178
      %p182 = scmp.eq.s32.totalorder %s16, 0
      %p183 = por %p181, %p182
      %p184 = scmp.ne.s32.totalorder %s176, %s178
      %p185 = scmp.eq.s32.totalorder %s21, 1
      %p186 = por %p184, %p185
      %p187 = scmp.ne.s32.totalorder %s178, %s179
      %p188 = scmp.eq.s32.totalorder %s21, 0
      %p189 = por %p187, %p188
      %p190 = scmp.ne.s32.totalorder %s178, %s179
      %p191 = scmp.eq.s32.totalorder %s22, 1
      %p192 = por %p190, %p191
      %p194 = scmp.ne.s32.totalorder %s179, %s193
      %p195 = scmp.eq.s32.totalorder %s22, 0
      %p196 = por %p194, %p195
      %s197 = ssub.s32 %s23, %s35
      %s198 = ssub.s32 %s24, %s31
      %s199 = sor.u32 %s197, %s198
      %p200 = scmp.eq.s32.totalorder %s199, 0
      %s202 = sadd.s32 %s201, 1
      %s203 = scalar_select %p200, %s201, %s202
      %p206 = pneg %p200
      %p207 = scmp.eq.s32.totalorder %s16, 1
      %p208 = por %p206, %p207
      %p209 = scmp.ne.s32.totalorder %s201, %s204
      %p210 = scmp.eq.s32.totalorder %s16, 0
      %p211 = por %p209, %p210
      %p212 = scmp.ne.s32.totalorder %s201, %s204
      %p213 = scmp.eq.s32.totalorder %s21, 1
      %p214 = por %p212, %p213
      %p215 = scmp.ne.s32.totalorder %s204, %s205
      %p216 = scmp.eq.s32.totalorder %s21, 0
      %p217 = por %p215, %p216
      %p218 = scmp.ne.s32.totalorder %s204, %s205
      %p219 = scmp.eq.s32.totalorder %s22, 1
      %p220 = por %p218, %p219
      %p222 = scmp.ne.s32.totalorder %s205, %s221
      %p223 = scmp.eq.s32.totalorder %s22, 0
      %p224 = por %p222, %p223
      %p225 = scmp.le.s32.totalorder 1, %s16
      %p226 = scmp.lt.s32.totalorder %s16, 3
      %p227 = pnand %p225, %p226
      %p228 = pneg %p227
      // Predicated region
      $region9: #{tpu_custom_call.1} parent=5 // pred_check
        _
      $region10: #{tpu_custom_call.1} parent=5 // pred_check_branch
        %230 = sbr.rel (%p227) target = $region12
      $region11: #{tpu_custom_call.1} parent=5 // pred_region
        %s231 = ssub.s32 %s16, 1
        // Predicated region
        $region13: #{tpu_custom_call.1} parent=11 // pred_check
          %p232 = pneg %p105
        $region14: #{tpu_custom_call.1} parent=11 // pred_check_branch
          %234 = sbr.rel (%p232) target = $region16
        $region15: #{tpu_custom_call.1} parent=11 // pred_region
          _
        $region16: #{tpu_custom_call.1} parent=11 // pred_fallthru
          _
        // Predicated region
        $region17: #{tpu_custom_call.1} parent=11 // pred_check
          %p235 = pneg %p126
        $region18: #{tpu_custom_call.1} parent=11 // pred_check_branch
          %237 = sbr.rel (%p235) target = $region20
        $region19: #{tpu_custom_call.1} parent=11 // pred_region
          _
        $region20: #{tpu_custom_call.1} parent=11 // pred_fallthru
          _
        // Predicated region
        $region21: #{tpu_custom_call.1} parent=11 // pred_check
          %p238 = pneg %p147
        $region22: #{tpu_custom_call.1} parent=11 // pred_check_branch
          %240 = sbr.rel (%p238) target = $region24
        $region23: #{tpu_custom_call.1} parent=11 // pred_region
          _
        $region24: #{tpu_custom_call.1} parent=11 // pred_fallthru
          _
        // Predicated region
        $region25: #{tpu_custom_call.1} parent=11 // pred_check
          %p241 = pneg %p168
        $region26: #{tpu_custom_call.1} parent=11 // pred_check_branch
          %243 = sbr.rel (%p241) target = $region28
        $region27: #{tpu_custom_call.1} parent=11 // pred_region
          _
        $region28: #{tpu_custom_call.1} parent=11 // pred_fallthru
          _
        // Predicated region
        $region29: #{tpu_custom_call.1} parent=11 // pred_check
          %p244 = pneg %p189
        $region30: #{tpu_custom_call.1} parent=11 // pred_check_branch
          %246 = sbr.rel (%p244) target = $region32
        $region31: #{tpu_custom_call.1} parent=11 // pred_region
          _
        $region32: #{tpu_custom_call.1} parent=11 // pred_fallthru
          _
      $region12: #{tpu_custom_call.1} parent=5 // pred_fallthru
        _
      %p247 = scmp.lt.s32.totalorder %s16, 2
      // Predicated region
      $region33: #{tpu_custom_call.1} parent=5 // pred_check
        %p248 = pneg %p247
      $region34: #{tpu_custom_call.1} parent=5 // pred_check_branch
        %250 = sbr.rel (%p248) target = $region36
      $region35: #{tpu_custom_call.1} parent=5 // pred_region
        // Predicated region
        $region37: #{tpu_custom_call.1} parent=35 // pred_check
          %p251 = pneg %p50
        $region38: #{tpu_custom_call.1} parent=35 // pred_check_branch
          %253 = sbr.rel (%p251) target = $region40
        $region39: #{tpu_custom_call.1} parent=35 // pred_region
          %p254 = scmp.lt.s32.totalorder %s23, 1
          %s255 = scalar_select %p254, %s23, 1
          %p256 = scmp.lt.s32.totalorder %s24, 0
          %s257 = scalar_select %p256, %s24, 0
          %s258 = smul.addr %s255, 32
          %s259 = sadd.s32 %s257, %s258
          %s260 = smul.addr %s259, 4
          %s261 = scalar_lea.vmem %s0, %s260
        $region40: #{tpu_custom_call.1} parent=35 // pred_fallthru
          _
        // Predicated region
        $region41: #{tpu_custom_call.1} parent=35 // pred_check
          %p262 = pneg %p78
        $region42: #{tpu_custom_call.1} parent=35 // pred_check_branch
          %264 = sbr.rel (%p262) target = $region44
        $region43: #{tpu_custom_call.1} parent=35 // pred_region
          %p265 = scmp.lt.s32.totalorder %s23, 1
          %s266 = scalar_select %p265, %s23, 1
          %p267 = scmp.lt.s32.totalorder %s24, 0
          %s268 = scalar_select %p267, %s24, 0
          %s269 = sadd.s32 %s268, %s266
          %s270 = smul.addr %s269, 2
          %s271 = scalar_lea.vmem %s1, %s270
        $region44: #{tpu_custom_call.1} parent=35 // pred_fallthru
          _
      $region36: #{tpu_custom_call.1} parent=5 // pred_fallthru
        _
      %p272 = scmp.le.s32.totalorder 1, %s16
      %p273 = scmp.lt.s32.totalorder %s16, 3
      %p274 = pnand %p272, %p273
      %p275 = pneg %p274
      // Predicated region
      $region45: #{tpu_custom_call.1} parent=5 // pred_check
        _
      $region46: #{tpu_custom_call.1} parent=5 // pred_check_branch
        %277 = sbr.rel (%p274) target = $region48
      $region47: #{tpu_custom_call.1} parent=5 // pred_region
        %s278 = ssub.s32 %s16, 1
        %p279 = scmp.lt.s32.totalorder %s25, 1
        %s280 = scalar_select %p279, %s25, 1
        %p281 = scmp.lt.s32.totalorder %s26, 0
        %s282 = scalar_select %p281, %s26, 0
        %s283 = smul.addr %s280, 32
        %s284 = sadd.s32 %s282, %s283
        %s285 = smul.addr %s284, 4
        %s286 = scalar_lea.vmem %s0, %s285
        %p287 = pneg %p56
        %p288 = pneg %p53
        %p289 = scmp.lt.s32.totalorder %s25, 1
        %s290 = scalar_select %p289, %s25, 1
        %p291 = scmp.lt.s32.totalorder %s26, 0
        %s292 = scalar_select %p291, %s26, 0
        %s293 = sadd.s32 %s292, %s290
        %s294 = smul.addr %s293, 2
        %s295 = scalar_lea.vmem %s1, %s294
        %p296 = pneg %p84
        %p297 = pneg %p81
        %p298 = pneg %p105
        %p299 = pneg %p102
        %p300 = pneg %p126
        %p301 = pneg %p123
        %p302 = pneg %p147
        %p303 = pneg %p144
        %p304 = pneg %p168
        %p305 = pneg %p165
        %p306 = pneg %p189
        %p307 = pneg %p186
        %p308 = pneg %p217
        %p309 = pneg %p214
        %s310 = sand.u32 %s204, 1
        %s311 = scalar_lea.sflag [#allocation4], %s310
        %s312 = sand.u32 %s204, 1
        %s313 = smul.addr %s312, 32
        %s314 = scalar_lea.vmem [#allocation3], %s313
        %p315 = scmp.lt.s32.totalorder %s25, 1
        %s316 = scalar_select %p315, %s25, 1
        %p317 = scmp.lt.s32.totalorder %s26, 0
        %s318 = scalar_select %p317, %s26, 0
        %s319 = smul.addr %s316, 32
        %s320 = sadd.s32 %s318, %s319
        %s321 = smul.addr %s320, 4
        %s322 = scalar_lea.vmem %s0, %s321
        %p323 = scmp.lt.s32.totalorder %s25, 1
        %s324 = scalar_select %p323, %s25, 1
        %p325 = scmp.lt.s32.totalorder %s26, 0
        %s326 = scalar_select %p325, %s26, 0
        %s327 = sadd.s32 %s326, %s324
        %s328 = smul.addr %s327, 2
        %s329 = scalar_lea.vmem %s1, %s328
        %v331 = vld [vmem:[%s2] sm:$0xf]
        %v332 = vld [vmem:[%s2 + $0x4] sm:$0xf]
        %v333 = vld [vmem:[%s2 + $0x8] sm:$0xf]
        %v334 = vld [vmem:[%s2 + $0xc] sm:$0xf]
        %v335 = vld [vmem:[%s3] sm:$0xf]
        %v336 = vld [vmem:[%s3 + $0x4] sm:$0xf]
        %v337 = vld [vmem:[%s3 + $0x8] sm:$0xf]
        %v338 = vld [vmem:[%s3 + $0xc] sm:$0xf]
        %v339 = vld [vmem:[%s4] sm:$0xff]
        %v340 = vld [vmem:[%s4 + $0x8] sm:$0xff]
        %v341 = vld [vmem:[%s4 + $0x10] sm:$0xff]
        %v342 = vld [vmem:[%s4 + $0x18] sm:$0xff]
        %v343 = vld [vmem:[%s5] sm:$0xf]
        %v344 = vld [vmem:[%s5 + $0x4] sm:$0xf]
        %v345 = vld [vmem:[%s5 + $0x8] sm:$0xf]
        %v346 = vld [vmem:[%s5 + $0xc] sm:$0xf]
        %v347 = vld [vmem:[%s5 + $0x10] sm:$0xf]
        %v348 = vld [vmem:[%s5 + $0x14] sm:$0xf]
        %v349 = vld [vmem:[%s5 + $0x18] sm:$0xf]
        %v350 = vld [vmem:[%s5 + $0x1c] sm:$0xf]
        %v351 = vld [vmem:[%s6] sm:$0xff]
        %v352 = vld [vmem:[%s6 + $0x8] sm:$0xff]
        %v353 = vld [vmem:[%s6 + $0x10] sm:$0xff]
        %v354 = vld [vmem:[%s6 + $0x18] sm:$0xff]
        %v355 = vld [vmem:[%s6 + $0x20] sm:$0xff]
        %v356 = vld [vmem:[%s6 + $0x28] sm:$0xff]
        %v357 = vld [vmem:[%s6 + $0x30] sm:$0xff]
        %v358 = vld [vmem:[%s6 + $0x38] sm:$0xff]
        %v359 = vld [vmem:[%s329] sm:$0x3]
        %361 = vset.pattern.permute.xlu0 0
        %362 = vperm.xlu0 %361, %v339
        %v363 = vpop.permute.xlu0 %362
        %366 = vset.pattern.permute.xlu0 0
        %367 = vperm.xlu0 %366, %v340
        %v368 = vpop.permute.xlu0 %367
        %371 = vset.pattern.permute.xlu0 0
        %372 = vperm.xlu0 %371, %v341
        %v373 = vpop.permute.xlu0 %372
        %376 = vset.pattern.permute.xlu0 0
        %377 = vperm.xlu0 %376, %v342
        %v378 = vpop.permute.xlu0 %377
        %v384 = vunpack.c.l.b16 %v335
        %v385 = vunpack.c.l.b16 %v336
        %v386 = vunpack.c.l.b16 %v337
        %v387 = vunpack.c.l.b16 %v338
        %v388 = vpack.c.b16 %v385, %v384
        %v389 = vpack.c.b16 %v387, %v386
        %vm390 = vcmask 31744
        %v392 = vsel %vm390, %v388, 0
        %v395 = vsel %vm390, %v389, 0
        %vm397 = vcmask 1041408
        %v399 = vsel %vm397, %v359, 0
        %401 = vmatprep.subr.bf16.mxu0 0
        %402 = vmatpush1.bf16.msra.mxu0 0
        %403 = vmatprep.subr.bf16.mxu0 0
        %404 = vmatpush1.bf16.msra.mxu0 0
        %405 = vmatprep.subr.bf16.mxu0 0
        %406 = vmatpush1.bf16.msra.mxu0 0
        %407 = vmatprep.subr.bf16.mxu0 0
        %408 = vmatpush1.bf16.msra.mxu0 0
        %409 = vmatprep.subr.bf16.mxu0 0
        %410 = vmatpush1.bf16.msra.mxu0 0
        %411 = vmatprep.subr.bf16.mxu0 0
        %412 = vmatpush1.bf16.msra.mxu0 0
        %413 = vmatprep.subr.bf16.mxu0 0
        %414 = vmatpush1.bf16.msra.mxu0 0
        %415 = vmatprep.subr.bf16.mxu0 0
        %416 = vmatpush1.bf16.msra.mxu0 %v399
        %417 = vmatprep.subr.bf16.mxu0 0
        %418 = vmatpush2.bf16.msra.mxu0 0
        %419 = vmatprep.subr.bf16.mxu0 0
        %420 = vmatpush2.bf16.msra.mxu0 0
        %421 = vmatprep.subr.bf16.mxu0 0
        %422 = vmatpush2.bf16.msra.mxu0 0
        %423 = vmatprep.subr.bf16.mxu0 0
        %424 = vmatpush2.bf16.msra.mxu0 0
        %425 = vmatprep.subr.bf16.mxu0 0
        %426 = vmatpush2.bf16.msra.mxu0 0
        %427 = vmatprep.subr.bf16.mxu0 0
        %428 = vmatpush2.bf16.msra.mxu0 0
        %429 = vmatprep.subr.bf16.mxu0 0
        %430 = vmatpush2.bf16.msra.mxu0 0
        %431 = vmatprep.subr.bf16.mxu0 0
        %432 = vmatpush2.bf16.msra.mxu0 0
        %433 = vmatprep.mubr.bf16.mxu0 0
        %434 = vmatmul.mubr.bf16.gmra.mxu0 %v392
        %v435 = vpop.f32.mrf.mxu0
        %v436 = vadd.f32 %v363, %v435
        %v437 = vpop.f32.mrf.mxu0
        %v438 = vpop.f32.mrf.mxu0
        %v439 = vadd.f32 %v368, %v438
        %v440 = vpop.f32.mrf.mxu0
        %441 = vmatprep.mubr.bf16.mxu0 0
        %442 = vmatmul.mubr.bf16.gmra.mxu0 %v395
        %v443 = vpop.f32.mrf.mxu0
        %v444 = vadd.f32 %v373, %v443
        %v445 = vpop.f32.mrf.mxu0
        %v446 = vpop.f32.mrf.mxu0
        %v447 = vadd.f32 %v378, %v446
        %v448 = vpop.f32.mrf.mxu0
        %449 = vdwg.mxu0
        %vm450 = vcmask 523264
        %451 = vst.msk [vmem:[#allocation2] sm:$0xff] %vm450, -inf
        %452 = vst.msk [vmem:[#allocation2 + $0x8] sm:$0xff] %vm450, -inf
        %453 = vst.msk [vmem:[#allocation2 + $0x10] sm:$0xff] %vm450, -inf
        %454 = vst.msk [vmem:[#allocation2 + $0x18] sm:$0xff] %vm450, -inf
        %455 = vst.msk [vmem:[#allocation2 + $0x20] sm:$0xff] %vm450, -inf
        %456 = vst.msk [vmem:[#allocation2 + $0x28] sm:$0xff] %vm450, -inf
        %457 = vst.msk [vmem:[#allocation2 + $0x30] sm:$0xff] %vm450, -inf
        %458 = vst.msk [vmem:[#allocation2 + $0x38] sm:$0xff] %vm450, -inf
        loop: start=0, step=1, limit=32
        $region49: #{tpu_custom_call.1} parent=47 // loop_pre_header
          _
        $region50: #{tpu_custom_call.1} parent=47 // loop_header
          %s460 = sphi 0, %s464
          %p461 = scmp.ge.s32.totalorder %s460, 32
        $region51: #{tpu_custom_call.1} parent=47 // loop_header_branch
          %463 = sbr.rel (%p461) target = $region55
        $region52: #{tpu_custom_call.1} parent=47 // loop_body
          %s465 = smul.addr %s460, 4
          %s466 = scalar_lea.vmem %s322, %s465
          %v467 = vld [vmem:[%s466] sm:$0xf]
          %v472 = vunpack.c.l.b16 %v331
          %v473 = vunpack.c.l.b16 %v332
          %v474 = vunpack.c.l.b16 %v333
          %v475 = vunpack.c.l.b16 %v334
          %v476 = vpack.c.b16 %v473, %v472
          %v477 = vpack.c.b16 %v475, %v474
          %vm478 = vcmask 56320
          %v480 = vsel %vm478, %v476, 0
          %v483 = vsel %vm478, %v477, 0
          %vm485 = vcmask 1042432
          %vm486 = vcmask 1043456
          %v487 = vsel %vm485, 4294967295, 65535
          %v488 = vsel %vm486, %v487, 0
          %v490 = vand.u32 %v467, %v488
          %492 = vmatprep.subr.bf16.mxu0 0
          %493 = vmatpush1.bf16.msra.mxu0 0
          %494 = vmatprep.subr.bf16.mxu0 0
          %495 = vmatpush1.bf16.msra.mxu0 0
          %496 = vmatprep.subr.bf16.mxu0 0
          %497 = vmatpush1.bf16.msra.mxu0 0
          %498 = vmatprep.subr.bf16.mxu0 0
          %499 = vmatpush1.bf16.msra.mxu0 0
          %500 = vmatprep.subr.bf16.mxu0 0
          %501 = vmatpush1.bf16.msra.mxu0 0
          %502 = vmatprep.subr.bf16.mxu0 0
          %503 = vmatpush1.bf16.msra.mxu0 0
          %504 = vmatprep.subr.bf16.mxu0 0
          %505 = vmatpush1.bf16.msra.mxu0 0
          %506 = vmatprep.subr.bf16.mxu0 0
          %507 = vmatpush1.bf16.msra.mxu0 %v490
          %508 = vmatprep.subr.bf16.mxu0 0
          %509 = vmatpush2.bf16.msra.mxu0 0
          %510 = vmatprep.subr.bf16.mxu0 0
          %511 = vmatpush2.bf16.msra.mxu0 0
          %512 = vmatprep.subr.bf16.mxu0 0
          %513 = vmatpush2.bf16.msra.mxu0 0
          %514 = vmatprep.subr.bf16.mxu0 0
          %515 = vmatpush2.bf16.msra.mxu0 0
          %516 = vmatprep.subr.bf16.mxu0 0
          %517 = vmatpush2.bf16.msra.mxu0 0
          %518 = vmatprep.subr.bf16.mxu0 0
          %519 = vmatpush2.bf16.msra.mxu0 0
          %520 = vmatprep.subr.bf16.mxu0 0
          %521 = vmatpush2.bf16.msra.mxu0 0
          %522 = vmatprep.subr.bf16.mxu0 0
          %523 = vmatpush2.bf16.msra.mxu0 0
          %524 = vmatprep.mubr.bf16.mxu0 0
          %525 = vmatmul.mubr.bf16.gmra.mxu0 %v480
          %v526 = vpop.f32.mrf.mxu0
          %v527 = vadd.f32 %v436, %v526
          %v528 = vpop.f32.mrf.mxu0
          %v529 = vpop.f32.mrf.mxu0
          %v530 = vadd.f32 %v439, %v529
          %v531 = vpop.f32.mrf.mxu0
          %532 = vmatprep.mubr.bf16.mxu0 0
          %533 = vmatmul.mubr.bf16.gmra.mxu0 %v483
          %v534 = vpop.f32.mrf.mxu0
          %v535 = vadd.f32 %v444, %v534
          %v536 = vpop.f32.mrf.mxu0
          %v537 = vpop.f32.mrf.mxu0
          %v538 = vadd.f32 %v447, %v537
          %v539 = vpop.f32.mrf.mxu0
          %540 = vdwg.mxu0
          %v541 = vmul.f32 %v527, 0.01
          %v542 = vmul.f32 %v530, 0.01
          %v543 = vmul.f32 %v535, 0.01
          %v544 = vmul.f32 %v538, 0.01
          %v545 = vmax.f32 %v527, %v541
          %v546 = vmax.f32 %v530, %v542
          %v547 = vmax.f32 %v535, %v543
          %v548 = vmax.f32 %v538, %v544
          %v549 = vpack.c.bf16 %v546, %v545
          %v550 = vpack.c.bf16 %v548, %v547
          %552 = vset.pattern.permute.xlu0 0
          %553 = vperm.xlu0 %552, %v351
          %v554 = vpop.permute.xlu0 %553
          %557 = vset.pattern.permute.xlu0 0
          %558 = vperm.xlu0 %557, %v352
          %v559 = vpop.permute.xlu0 %558
          %562 = vset.pattern.permute.xlu0 0
          %563 = vperm.xlu0 %562, %v353
          %v564 = vpop.permute.xlu0 %563
          %567 = vset.pattern.permute.xlu0 0
          %568 = vperm.xlu0 %567, %v354
          %v569 = vpop.permute.xlu0 %568
          %572 = vset.pattern.permute.xlu0 0
          %573 = vperm.xlu0 %572, %v355
          %v574 = vpop.permute.xlu0 %573
          %577 = vset.pattern.permute.xlu0 0
          %578 = vperm.xlu0 %577, %v356
          %v579 = vpop.permute.xlu0 %578
          %582 = vset.pattern.permute.xlu0 0
          %583 = vperm.xlu0 %582, %v357
          %v584 = vpop.permute.xlu0 %583
          %587 = vset.pattern.permute.xlu0 0
          %588 = vperm.xlu0 %587, %v358
          %v589 = vpop.permute.xlu0 %588
          %v599 = vunpack.c.l.b16 %v343
          %v600 = vunpack.c.l.b16 %v344
          %v601 = vunpack.c.l.b16 %v345
          %v602 = vunpack.c.l.b16 %v346
          %v603 = vunpack.c.l.b16 %v347
          %v604 = vunpack.c.l.b16 %v348
          %v605 = vunpack.c.l.b16 %v349
          %v606 = vunpack.c.l.b16 %v350
          %v607 = vpack.c.b16 %v600, %v599
          %v608 = vpack.c.b16 %v602, %v601
          %v609 = vpack.c.b16 %v604, %v603
          %v610 = vpack.c.b16 %v606, %v605
          %vm611 = vcmask 261120
          %v613 = vsel %vm611, %v607, 0
          %v616 = vsel %vm611, %v608, 0
          %v619 = vsel %vm611, %v609, 0
          %v622 = vsel %vm611, %v610, 0
          %624 = vmatprep.subr.bf16.mxu0 0
          %625 = vmatpush1.bf16.msra.mxu0 0
          %626 = vmatprep.subr.bf16.mxu0 0
          %627 = vmatpush1.bf16.msra.mxu0 0
          %628 = vmatprep.subr.bf16.mxu0 0
          %629 = vmatpush1.bf16.msra.mxu0 0
          %630 = vmatprep.subr.bf16.mxu0 0
          %631 = vmatpush1.bf16.msra.mxu0 0
          %632 = vmatprep.subr.bf16.mxu0 0
          %633 = vmatpush1.bf16.msra.mxu0 0
          %634 = vmatprep.subr.bf16.mxu0 0
          %635 = vmatpush1.bf16.msra.mxu0 0
          %636 = vmatprep.subr.bf16.mxu0 0
          %637 = vmatpush1.bf16.msra.mxu0 %v550
          %638 = vmatprep.subr.bf16.mxu0 0
          %639 = vmatpush1.bf16.msra.mxu0 %v549
          %640 = vmatprep.subr.bf16.mxu0 0
          %641 = vmatpush2.bf16.msra.mxu0 0
          %642 = vmatprep.subr.bf16.mxu0 0
          %643 = vmatpush2.bf16.msra.mxu0 0
          %644 = vmatprep.subr.bf16.mxu0 0
          %645 = vmatpush2.bf16.msra.mxu0 0
          %646 = vmatprep.subr.bf16.mxu0 0
          %647 = vmatpush2.bf16.msra.mxu0 0
          %648 = vmatprep.subr.bf16.mxu0 0
          %649 = vmatpush2.bf16.msra.mxu0 0
          %650 = vmatprep.subr.bf16.mxu0 0
          %651 = vmatpush2.bf16.msra.mxu0 0
          %652 = vmatprep.subr.bf16.mxu0 0
          %653 = vmatpush2.bf16.msra.mxu0 0
          %654 = vmatprep.subr.bf16.mxu0 0
          %655 = vmatpush2.bf16.msra.mxu0 0
          %656 = vmatprep.mubr.bf16.mxu0 0
          %657 = vmatmul.mubr.bf16.gmra.mxu0 %v613
          %v658 = vpop.f32.mrf.mxu0
          %v659 = vadd.f32 %v554, %v658
          %v660 = vpop.f32.mrf.mxu0
          %v661 = vpop.f32.mrf.mxu0
          %v662 = vadd.f32 %v559, %v661
          %v663 = vpop.f32.mrf.mxu0
          %664 = vmatprep.mubr.bf16.mxu0 0
          %665 = vmatmul.mubr.bf16.gmra.mxu0 %v616
          %v666 = vpop.f32.mrf.mxu0
          %v667 = vadd.f32 %v564, %v666
          %v668 = vpop.f32.mrf.mxu0
          %v669 = vpop.f32.mrf.mxu0
          %v670 = vadd.f32 %v569, %v669
          %v671 = vpop.f32.mrf.mxu0
          %672 = vmatprep.mubr.bf16.mxu0 0
          %673 = vmatmul.mubr.bf16.gmra.mxu0 %v619
          %v674 = vpop.f32.mrf.mxu0
          %v675 = vadd.f32 %v574, %v674
          %v676 = vpop.f32.mrf.mxu0
          %v677 = vpop.f32.mrf.mxu0
          %v678 = vadd.f32 %v579, %v677
          %v679 = vpop.f32.mrf.mxu0
          %680 = vmatprep.mubr.bf16.mxu0 0
          %681 = vmatmul.mubr.bf16.gmra.mxu0 %v622
          %v682 = vpop.f32.mrf.mxu0
          %v683 = vadd.f32 %v584, %v682
          %v684 = vpop.f32.mrf.mxu0
          %v685 = vpop.f32.mrf.mxu0
          %v686 = vadd.f32 %v589, %v685
          %v687 = vpop.f32.mrf.mxu0
          %688 = vdwg.mxu0
          %v689 = vmul.f32 %v659, 0.01
          %v690 = vmul.f32 %v662, 0.01
          %v691 = vmul.f32 %v667, 0.01
          %v692 = vmul.f32 %v670, 0.01
          %v693 = vmul.f32 %v675, 0.01
          %v694 = vmul.f32 %v678, 0.01
          %v695 = vmul.f32 %v683, 0.01
          %v696 = vmul.f32 %v686, 0.01
          %v697 = vmax.f32 %v659, %v689
          %v698 = vmax.f32 %v662, %v690
          %v699 = vmax.f32 %v667, %v691
          %v700 = vmax.f32 %v670, %v692
          %v701 = vmax.f32 %v675, %v693
          %v702 = vmax.f32 %v678, %v694
          %v703 = vmax.f32 %v683, %v695
          %v704 = vmax.f32 %v686, %v696
          %v705 = vld [vmem:[#allocation2] sm:$0xff]
          %v706 = vld [vmem:[#allocation2 + $0x8] sm:$0xff]
          %v707 = vld [vmem:[#allocation2 + $0x10] sm:$0xff]
          %v708 = vld [vmem:[#allocation2 + $0x18] sm:$0xff]
          %v709 = vld [vmem:[#allocation2 + $0x20] sm:$0xff]
          %v710 = vld [vmem:[#allocation2 + $0x28] sm:$0xff]
          %v711 = vld [vmem:[#allocation2 + $0x30] sm:$0xff]
          %v712 = vld [vmem:[#allocation2 + $0x38] sm:$0xff]
          %v713 = vmax.f32 %v705, %v697
          %v714 = vmax.f32 %v706, %v698
          %v715 = vmax.f32 %v707, %v699
          %v716 = vmax.f32 %v708, %v700
          %v717 = vmax.f32 %v709, %v701
          %v718 = vmax.f32 %v710, %v702
          %v719 = vmax.f32 %v711, %v703
          %v720 = vmax.f32 %v712, %v704
          %721 = vst.msk [vmem:[#allocation2] sm:$0xff] %vm450, %v713
          %722 = vst.msk [vmem:[#allocation2 + $0x8] sm:$0xff] %vm450, %v714
          %723 = vst.msk [vmem:[#allocation2 + $0x10] sm:$0xff] %vm450, %v715
          %724 = vst.msk [vmem:[#allocation2 + $0x18] sm:$0xff] %vm450, %v716
          %725 = vst.msk [vmem:[#allocation2 + $0x20] sm:$0xff] %vm450, %v717
          %726 = vst.msk [vmem:[#allocation2 + $0x28] sm:$0xff] %vm450, %v718
          %727 = vst.msk [vmem:[#allocation2 + $0x30] sm:$0xff] %vm450, %v719
          %728 = vst.msk [vmem:[#allocation2 + $0x38] sm:$0xff] %vm450, %v720
        $region53: #{tpu_custom_call.1} parent=47 // loop_footer
          %s464 = sadd.s32 1, %s460
        $region54: #{tpu_custom_call.1} parent=47 // loop_footer_branch
          %459 = sbr.rel target = $region50
        $region55: #{tpu_custom_call.1} parent=47 // loop_exit
          _
        %v729 = vld [vmem:[#allocation2] sm:$0xff]
        %v730 = vld [vmem:[#allocation2 + $0x8] sm:$0xff]
        %v731 = vld [vmem:[#allocation2 + $0x10] sm:$0xff]
        %v732 = vld [vmem:[#allocation2 + $0x18] sm:$0xff]
        %v733 = vld [vmem:[#allocation2 + $0x20] sm:$0xff]
        %v734 = vld [vmem:[#allocation2 + $0x28] sm:$0xff]
        %v735 = vld [vmem:[#allocation2 + $0x30] sm:$0xff]
        %v736 = vld [vmem:[#allocation2 + $0x38] sm:$0xff]
        %v737 = vpack.c.bf16 %v730, %v729
        %v738 = vpack.c.bf16 %v732, %v731
        %v739 = vpack.c.bf16 %v734, %v733
        %v740 = vpack.c.bf16 %v736, %v735
        %v745 = vunpack.c.l.b16 %v737
        %v746 = vunpack.c.h.b16 %v737
        %v747 = vunpack.c.l.b16 %v738
        %v748 = vunpack.c.h.b16 %v738
        %v749 = vunpack.c.l.b16 %v739
        %v750 = vunpack.c.h.b16 %v739
        %v751 = vunpack.c.l.b16 %v740
        %v752 = vunpack.c.h.b16 %v740
        %v753 = vpack.c.b16 %v745, %v745
        %v754 = vpack.c.b16 %v746, %v746
        %v755 = vpack.c.b16 %v747, %v747
        %v756 = vpack.c.b16 %v748, %v748
        %v757 = vpack.c.b16 %v749, %v749
        %v758 = vpack.c.b16 %v750, %v750
        %v759 = vpack.c.b16 %v751, %v751
        %v760 = vpack.c.b16 %v752, %v752
        %vm769 = vcmask 519168
        %770 = vst.msk [vmem:[%s314] sm:$0xf] %vm769, %v753
        %771 = vst.msk [vmem:[%s314 + $0x4] sm:$0xf] %vm769, %v754
        %772 = vst.msk [vmem:[%s314 + $0x8] sm:$0xf] %vm769, %v755
        %773 = vst.msk [vmem:[%s314 + $0xc] sm:$0xf] %vm769, %v756
        %774 = vst.msk [vmem:[%s314 + $0x10] sm:$0xf] %vm769, %v757
        %775 = vst.msk [vmem:[%s314 + $0x14] sm:$0xf] %vm769, %v758
        %776 = vst.msk [vmem:[%s314 + $0x18] sm:$0xf] %vm769, %v759
        %777 = vst.msk [vmem:[%s314 + $0x1c] sm:$0xf] %vm769, %v760
        %s778 = sand.u32 %s204, 1
        %s779 = scalar_lea.sflag [#allocation4], %s778
        %s780 = sand.u32 %s204, 1
        %s781 = smul.addr %s780, 32
        %s782 = scalar_lea.vmem [#allocation3], %s781
        // Predicated region
        $region56: #{tpu_custom_call.1} parent=47 // pred_check
          %p783 = pneg %p214
        $region57: #{tpu_custom_call.1} parent=47 // pred_check_branch
          %785 = sbr.rel (%p783) target = $region59
        $region58: #{tpu_custom_call.1} parent=47 // pred_region
          %s787 = ssub.s32 512, 512
          %788 = vsyncadd %s779, %s787
          %s789 = smul.addr %s25, 8
          %s790 = sadd.s32 %s26, %s789
          %s791 = smul.addr %s790, 64
          %s792 = scalar_lea.hbm %s7, %s791
          %s793 = sshll.u32 %s782, 4
          %s794 = int_to_ptr.vmem [resolvable:$true] %s793
          %799 = dma.vmem_to_hbm [thread:$0]  %s794, 512, %s792, %s779, 64, 64, 4
        $region59: #{tpu_custom_call.1} parent=47 // pred_fallthru
          _
      $region48: #{tpu_custom_call.1} parent=5 // pred_fallthru
        _
      %p800 = scmp.le.s32.totalorder 2, %s16
      // Predicated region
      $region60: #{tpu_custom_call.1} parent=5 // pred_check
        %p801 = pneg %p800
      $region61: #{tpu_custom_call.1} parent=5 // pred_check_branch
        %803 = sbr.rel (%p801) target = $region63
      $region62: #{tpu_custom_call.1} parent=5 // pred_region
        %s804 = ssub.s32 %s16, 2
        // Predicated region
        $region64: #{tpu_custom_call.1} parent=62 // pred_check
          %p805 = pneg %p220
        $region65: #{tpu_custom_call.1} parent=62 // pred_check_branch
          %807 = sbr.rel (%p805) target = $region67
        $region66: #{tpu_custom_call.1} parent=62 // pred_region
          %s808 = sand.u32 %s205, 1
          %s809 = scalar_lea.sflag [#allocation4], %s808
          %s810 = sand.u32 %s205, 1
          %s811 = smul.addr %s810, 32
          %s812 = scalar_lea.vmem [#allocation3], %s811
          %813 = dma.done %s809, 512
        $region67: #{tpu_custom_call.1} parent=62 // pred_fallthru
          _
      $region63: #{tpu_custom_call.1} parent=5 // pred_fallthru
        _
    $region6: #{tpu_custom_call.1} parent=1 // loop_footer
      %s20 = sadd.s32 1, %s16
    $region7: #{tpu_custom_call.1} parent=1 // loop_footer_branch
      %15 = sbr.rel target = $region3
    $region8: #{tpu_custom_call.1} parent=1 // loop_exit
      _
    %814 = vsyncpa [#allocation4], 1
    %s815 = scalar_lea.sflag [#allocation4], 1
    %816 = vsyncpa %s815, 1

</llo_original>
